<compile_context>
chip_gen: v7x
topology: tpu7x:2x2x1
jax: 0.10.0
libtpu: 0.0.40
codegen_flags: <defaults>
</compile_context>

<pallas_src>
import jax
import jax.numpy as jnp
from jax.experimental import pallas as pl
from jax.experimental.pallas import tpu as pltpu

INPUT_DIM = 256
HIDDEN1 = 128
HIDDEN2 = 64
OUTPUT_DIM = 2


def _round_up(n, m):
    return ((n + m - 1) // m) * m


def mlp_kernel(x_ref, w1_ref, b1_ref, w2_ref, b2_ref, w3d_ref, b3d_ref, o_ref):
    # x tile arrives in its native dtype (f32 or bf16); cast to bf16 in-kernel
    # for the MXU. Accumulation / biases / activations stay f32.
    x = x_ref[...].astype(jnp.bfloat16)

    # layer1 + ReLU
    h1 = jnp.dot(x, w1_ref[...], preferred_element_type=jnp.float32) + b1_ref[...]
    h1 = jnp.maximum(h1, 0.0)

    # layer2 + ReLU
    h2 = jnp.dot(h1.astype(jnp.bfloat16), w2_ref[...],
                 preferred_element_type=jnp.float32) + b2_ref[...]
    h2 = jnp.maximum(h2, 0.0)

    # layer3 collapsed to the 2-class logit difference:
    #   d = l0 - l1 = h2 @ (w3[:,0]-w3[:,1]) + (b3[0]-b3[1])
    #   softmax([l0,l1]) = [sigmoid(d), 1-sigmoid(d)]   (exact & stable)
    d = jnp.dot(h2.astype(jnp.bfloat16), w3d_ref[...],
                preferred_element_type=jnp.float32) + b3d_ref[...]
    p0 = 1.0 / (1.0 + jnp.exp(-d))

    o_ref[:, 0:1] = p0.astype(o_ref.dtype)
    o_ref[:, 1:2] = (1.0 - p0).astype(o_ref.dtype)


def prepare_params(params):
    """One-time conversion of raw f32 params into kernel-ready form.

    Weights -> bf16 (MXU native), biases -> f32, layer3 collapsed to its
    2-class difference form. Call once at init, not per forward.
    """
    w1, b1, w2, b2, w3, b3 = params
    w1b = w1.astype(jnp.bfloat16)                       # (256, 128)
    w2b = w2.astype(jnp.bfloat16)                       # (128, 64)
    w3d = (w3[:, 0:1] - w3[:, 1:2]).astype(jnp.bfloat16)  # (64, 1)
    b1f = b1.reshape(1, HIDDEN1).astype(jnp.float32)
    b2f = b2.reshape(1, HIDDEN2).astype(jnp.float32)
    b3v = b3.reshape(-1).astype(jnp.float32)
    b3d = (b3v[0] - b3v[1]).reshape(1, 1)               # (1, 1)
    return (w1b, b1f, w2b, b2f, w3d, b3d)


def _jnp_forward(x2d, prepared):
    """Plain-XLA path with the same math/precision as the kernel."""
    w1b, b1f, w2b, b2f, w3d, b3d = prepared
    h = x2d.astype(jnp.bfloat16)
    h1 = jnp.maximum(jnp.dot(h, w1b, preferred_element_type=jnp.float32) + b1f, 0.0)
    h2 = jnp.maximum(
        jnp.dot(h1.astype(jnp.bfloat16), w2b, preferred_element_type=jnp.float32) + b2f, 0.0)
    d = jnp.dot(h2.astype(jnp.bfloat16), w3d, preferred_element_type=jnp.float32) + b3d
    p0 = jax.nn.sigmoid(d)
    return jnp.concatenate([p0, 1.0 - p0], axis=-1)


def net_forward(x, prepared, *, block_rows=2048, min_kernel_batch=1024):
    """x: any shape (B, ...) that flattens to (B, 256). Returns (B, 2) float32.

    `prepared` is the output of prepare_params(). For B < min_kernel_batch the
    plain-XLA path is used (pallas launch + pipeline overhead dominates there).
    """
    b = x.shape[0]
    x2d = x.reshape(b, -1)
    assert x2d.shape[1] == INPUT_DIM, f"expected {INPUT_DIM} features, got {x2d.shape[1]}"

    if b < min_kernel_batch:
        return _jnp_forward(x2d, prepared)

    w1b, b1f, w2b, b2f, w3d, b3d = prepared

    # Batch tile: multiple of 8 sublanes, big enough to amortize the ~0.35us
    # per-grid-step overhead, but capped at ceil(b/2) so v7x's two TensorCores
    # both get work on the "parallel" batch axis.
    bt = min(block_rows, _round_up(pl.cdiv(b, 2), 8))
    bt = max(8, _round_up(bt, 8))
    grid = (pl.cdiv(b, bt),)   # ragged last block; OOB output rows are masked

    def const_spec(shape):
        return pl.BlockSpec(shape, lambda i: (0,) * len(shape))

    x_bytes = x2d.dtype.itemsize
    flops = 2 * b * (INPUT_DIM * HIDDEN1 + HIDDEN1 * HIDDEN2 + HIDDEN2 * 1)
    bytes_accessed = (
        b * INPUT_DIM * x_bytes                                   # x (native dtype, read once)
        + b * OUTPUT_DIM * 4                                      # out (f32)
        + (INPUT_DIM * HIDDEN1 + HIDDEN1 * HIDDEN2 + HIDDEN2 * 1) * 2  # weights (bf16)
        + (HIDDEN1 + HIDDEN2 + 1) * 4                             # biases (f32)
    )

    out = pl.pallas_call(
        mlp_kernel,
        out_shape=jax.ShapeDtypeStruct((grid[0] * bt, OUTPUT_DIM), jnp.float32),
        grid=grid,
        in_specs=[
            pl.BlockSpec((bt, INPUT_DIM), lambda i: (i, 0)),      # streamed x tiles
            const_spec(w1b.shape), const_spec(b1f.shape),         # VMEM-resident params
            const_spec(w2b.shape), const_spec(b2f.shape),
            const_spec(w3d.shape), const_spec(b3d.shape),
        ],
        out_specs=pl.BlockSpec((bt, OUTPUT_DIM), lambda i: (i, 0)),
        compiler_params=pltpu.CompilerParams(
            dimension_semantics=("parallel",),
            vmem_limit_bytes=32 * 1024 * 1024),
        cost_estimate=pl.CostEstimate(
            flops=flops, transcendentals=b, bytes_accessed=bytes_accessed),
    )(x2d, w1b, b1f, w2b, b2f, w3d, b3d)

    return out[:b]


def init_params(key):
    """Deterministic init mirroring nn.Linear shapes (stored transposed: (in, out))."""
    k1, k2, k3, k4, k5, k6 = jax.random.split(key, 6)

    def lin_init(kw, kb, fan_in, fan_out):
        bound = 1.0 / jnp.sqrt(fan_in)
        w = jax.random.uniform(kw, (fan_in, fan_out), jnp.float32, -bound, bound)
        b = jax.random.uniform(kb, (1, fan_out), jnp.float32, -bound, bound)
        return w, b

    w1, b1 = lin_init(k1, k2, INPUT_DIM, HIDDEN1)
    w2, b2 = lin_init(k3, k4, HIDDEN1, HIDDEN2)
    w3, b3 = lin_init(k5, k6, HIDDEN2, OUTPUT_DIM)
    return (w1, b1, w2, b2, w3, b3)


def reference_forward_bf16(x, params):
    """Pure-JAX reference with bf16 inputs / f32 accumulation and a standard softmax
    (independent check that the closed-form 2-class softmax matches)."""
    w1, b1, w2, b2, w3, b3 = params
    h = x.reshape(x.shape[0], -1).astype(jnp.bfloat16)
    w1b, w2b, w3b = (w.astype(jnp.bfloat16) for w in (w1, w2, w3))
    h1 = jnp.maximum(jnp.dot(h, w1b, preferred_element_type=jnp.float32) + b1, 0.0)
    h2 = jnp.maximum(
        jnp.dot(h1.astype(jnp.bfloat16), w2b, preferred_element_type=jnp.float32) + b2, 0.0)
    logits = jnp.dot(h2.astype(jnp.bfloat16), w3b, preferred_element_type=jnp.float32) + b3
    return jax.nn.softmax(logits, axis=1)


def reference_forward_f32(x, params):
    """Full-precision reference (loose check: bf16 kernel vs f32 math)."""
    w1, b1, w2, b2, w3, b3 = params
    h = x.reshape(x.shape[0], -1).astype(jnp.float32)
    h = jnp.maximum(h @ w1 + b1, 0.0)
    h = jnp.maximum(h @ w2 + b2, 0.0)
    return jax.nn.softmax(h @ w3 + b3, axis=1)


if __name__ == "__main__":
    key = jax.random.PRNGKey(0)
    kx, kx2, kp = jax.random.split(key, 3)

    params = init_params(kp)
    prepared = prepare_params(params)

    # Small input: batch=8, flattens from (8, 16, 16) -> (8, 256).
    x = jax.random.normal(kx, (8, 16, 16), dtype=jnp.float32)

    # Force the Pallas kernel path (min_kernel_batch=0) so the kernel is exercised.
    out = net_forward(x, prepared, min_kernel_batch=0)
    out = jax.block_until_ready(out)
    assert out.shape == (8, OUTPUT_DIM)

    ref_bf16 = reference_forward_bf16(x, params)
    ref_f32 = reference_forward_f32(x, params)
    assert jnp.allclose(out, ref_bf16, atol=1e-3, rtol=1e-3), "mismatch vs bf16-matched reference"
    assert jnp.allclose(out, ref_f32, atol=3e-2, rtol=3e-2), "mismatch vs f32 reference"
    assert jnp.allclose(jnp.sum(out, axis=1), 1.0, atol=1e-5), "softmax rows must sum to 1"

    # Small-batch fallback path agrees with the kernel path.
    out_fb = jax.block_until_ready(net_forward(x, prepared))   # b=8 < min_kernel_batch
    assert jnp.allclose(out, out_fb, atol=1e-3, rtol=1e-3), "fallback vs kernel mismatch"

    # Ragged-grid check: b=50 -> bt=32, grid=2, last block partial (masked writes).
    x2 = jax.random.normal(kx2, (50, INPUT_DIM), dtype=jnp.float32)
    out2 = jax.block_until_ready(net_forward(x2, prepared, min_kernel_batch=0))
    assert out2.shape == (50, OUTPUT_DIM)
    assert jnp.allclose(out2, reference_forward_bf16(x2, params), atol=1e-3, rtol=1e-3), \
        "ragged-grid mismatch vs bf16-matched reference"
    assert jnp.allclose(jnp.sum(out2, axis=1), 1.0, atol=1e-5)

    print("KERNEL_OK")
</pallas_src>

<mosaic_0001>
module attributes {stable_mosaic.version = 11 : i64} {
  func.func @mlp_kernel(%arg0: i32, %arg1: memref<8x256xf32, #tpu.memory_space<vmem>>, %arg2: memref<256x128xbf16, #tpu.memory_space<vmem>>, %arg3: memref<1x128xf32, #tpu.memory_space<vmem>>, %arg4: memref<128x64xbf16, #tpu.memory_space<vmem>>, %arg5: memref<1x64xf32, #tpu.memory_space<vmem>>, %arg6: memref<64x1xbf16, #tpu.memory_space<vmem>>, %arg7: memref<1x1xf32, #tpu.memory_space<vmem>>, %arg8: memref<8x2xf32, #tpu.memory_space<vmem>>) attributes {dimension_semantics = [#tpu.dimension_semantics<parallel>], iteration_bounds = array<i64: 1>, scalar_prefetch = 0 : i64, scratch_operands = 0 : i64, tpu.core_type = #tpu.core_type<tc>, window_params = [{transform_indices = @transform_0, window_bounds = array<i64: 8, 256>}, {pipeline_mode = #tpu.pipeline_mode<synchronous>, transform_indices = @transform_1, window_bounds = array<i64: 256, 128>}, {pipeline_mode = #tpu.pipeline_mode<synchronous>, transform_indices = @transform_2, window_bounds = array<i64: 1, 128>}, {pipeline_mode = #tpu.pipeline_mode<synchronous>, transform_indices = @transform_3, window_bounds = array<i64: 128, 64>}, {pipeline_mode = #tpu.pipeline_mode<synchronous>, transform_indices = @transform_4, window_bounds = array<i64: 1, 64>}, {pipeline_mode = #tpu.pipeline_mode<synchronous>, transform_indices = @transform_5, window_bounds = array<i64: 64, 1>}, {pipeline_mode = #tpu.pipeline_mode<synchronous>, transform_indices = @transform_6, window_bounds = array<i64: 1, 1>}, {transform_indices = @transform_7, window_bounds = array<i64: 8, 2>}]} {
    %c0 = arith.constant 0 : index
    %c0_0 = arith.constant 0 : index
    %0 = vector.load %arg1[%c0, %c0_0] : memref<8x256xf32, #tpu.memory_space<vmem>>, vector<8x256xf32>
    %1 = arith.truncf %0 : vector<8x256xf32> to vector<8x256xbf16>
    %c0_1 = arith.constant 0 : index
    %c0_2 = arith.constant 0 : index
    %2 = vector.load %arg2[%c0_1, %c0_2] : memref<256x128xbf16, #tpu.memory_space<vmem>>, vector<256x128xbf16>
    %cst = arith.constant dense<0.000000e+00> : vector<8x128xf32>
    %3 = tpu.matmul %1, %2, %cst {dimension_numbers = #tpu.dot_dimension_numbers<[1], [0], [0], [1], [0, 0, 1, 1], [], []>} : vector<8x256xbf16>, vector<256x128xbf16>, vector<8x128xf32> -> vector<8x128xf32>
    %c0_3 = arith.constant 0 : index
    %c0_4 = arith.constant 0 : index
    %4 = vector.load %arg3[%c0_3, %c0_4] : memref<1x128xf32, #tpu.memory_space<vmem>>, vector<1x128xf32>
    %5 = vector.broadcast %4 : vector<1x128xf32> to vector<8x128xf32>
    %6 = arith.addf %3, %5 : vector<8x128xf32>
    %cst_5 = arith.constant 0.000000e+00 : f32
    %7 = vector.broadcast %cst_5 : f32 to vector<8x128xf32>
    %8 = arith.maximumf %6, %7 : vector<8x128xf32>
    %9 = arith.truncf %8 : vector<8x128xf32> to vector<8x128xbf16>
    %c0_6 = arith.constant 0 : index
    %c0_7 = arith.constant 0 : index
    %10 = vector.load %arg4[%c0_6, %c0_7] : memref<128x64xbf16, #tpu.memory_space<vmem>>, vector<128x64xbf16>
    %cst_8 = arith.constant dense<0.000000e+00> : vector<8x64xf32>
    %11 = tpu.matmul %9, %10, %cst_8 {dimension_numbers = #tpu.dot_dimension_numbers<[1], [0], [0], [1], [0, 0, 1, 1], [], []>} : vector<8x128xbf16>, vector<128x64xbf16>, vector<8x64xf32> -> vector<8x64xf32>
    %c0_9 = arith.constant 0 : index
    %c0_10 = arith.constant 0 : index
    %12 = vector.load %arg5[%c0_9, %c0_10] : memref<1x64xf32, #tpu.memory_space<vmem>>, vector<1x64xf32>
    %13 = vector.broadcast %12 : vector<1x64xf32> to vector<8x64xf32>
    %14 = arith.addf %11, %13 : vector<8x64xf32>
    %cst_11 = arith.constant 0.000000e+00 : f32
    %15 = vector.broadcast %cst_11 : f32 to vector<8x64xf32>
    %16 = arith.maximumf %14, %15 : vector<8x64xf32>
    %17 = arith.truncf %16 : vector<8x64xf32> to vector<8x64xbf16>
    %c0_12 = arith.constant 0 : index
    %c0_13 = arith.constant 0 : index
    %18 = vector.load %arg6[%c0_12, %c0_13] : memref<64x1xbf16, #tpu.memory_space<vmem>>, vector<64x1xbf16>
    %cst_14 = arith.constant dense<0.000000e+00> : vector<8x1xf32>
    %19 = tpu.matmul %17, %18, %cst_14 {dimension_numbers = #tpu.dot_dimension_numbers<[1], [0], [0], [1], [0, 0, 1, 1], [], []>} : vector<8x64xbf16>, vector<64x1xbf16>, vector<8x1xf32> -> vector<8x1xf32>
    %c0_15 = arith.constant 0 : index
    %c0_16 = arith.constant 0 : index
    %20 = vector.load %arg7[%c0_15, %c0_16] : memref<1x1xf32, #tpu.memory_space<vmem>>, vector<1x1xf32>
    %21 = vector.broadcast %20 : vector<1x1xf32> to vector<8x1xf32>
    %22 = arith.addf %19, %21 : vector<8x1xf32>
    %cst_17 = arith.constant 0.000000e+00 : f32
    %23 = vector.broadcast %cst_17 : f32 to vector<8x1xf32>
    %24 = arith.subf %23, %22 : vector<8x1xf32>
    %25 = math.exp %24 : vector<8x1xf32>
    %cst_18 = arith.constant 1.000000e+00 : f32
    %26 = vector.broadcast %cst_18 : f32 to vector<8x1xf32>
    %27 = arith.addf %26, %25 : vector<8x1xf32>
    %cst_19 = arith.constant 1.000000e+00 : f32
    %28 = vector.broadcast %cst_19 : f32 to vector<8x1xf32>
    %29 = arith.divf %28, %27 : vector<8x1xf32>
    %c0_20 = arith.constant 0 : index
    %c0_21 = arith.constant 0 : index
    %30 = vector.load %arg8[%c0_20, %c0_21] : memref<8x2xf32, #tpu.memory_space<vmem>>, vector<8x1xf32>
    tpu.vector_store %arg8[%c0_20, %c0_21], %29 {strides = array<i32>} : memref<8x2xf32, #tpu.memory_space<vmem>>, vector<8x1xf32>,
    %cst_22 = arith.constant 1.000000e+00 : f32
    %31 = vector.broadcast %cst_22 : f32 to vector<8x1xf32>
    %32 = arith.subf %31, %29 : vector<8x1xf32>
    %c0_23 = arith.constant 0 : index
    %c1 = arith.constant 1 : index
    %33 = vector.load %arg8[%c0_23, %c1] : memref<8x2xf32, #tpu.memory_space<vmem>>, vector<8x1xf32>
    tpu.vector_store %arg8[%c0_23, %c1], %32 {strides = array<i32>} : memref<8x2xf32, #tpu.memory_space<vmem>>, vector<8x1xf32>,
    return
  }
  func.func @transform_0(%arg0: i32) -> (i32, i32) {
    %c0_i32 = arith.constant 0 : i32
    %c0_i32_0 = arith.constant 0 : i32
    return %arg0, %c0_i32 : i32, i32
  }
  func.func @transform_1(%arg0: i32) -> (i32, i32) {
    %c0_i32 = arith.constant 0 : i32
    %c0_i32_0 = arith.constant 0 : i32
    %c0_i32_1 = arith.constant 0 : i32
    return %c0_i32, %c0_i32_0 : i32, i32
  }
  func.func @transform_2(%arg0: i32) -> (i32, i32) {
    %c0_i32 = arith.constant 0 : i32
    %c0_i32_0 = arith.constant 0 : i32
    %c0_i32_1 = arith.constant 0 : i32
    return %c0_i32, %c0_i32_0 : i32, i32
  }
  func.func @transform_3(%arg0: i32) -> (i32, i32) {
    %c0_i32 = arith.constant 0 : i32
    %c0_i32_0 = arith.constant 0 : i32
    %c0_i32_1 = arith.constant 0 : i32
    return %c0_i32, %c0_i32_0 : i32, i32
  }
  func.func @transform_4(%arg0: i32) -> (i32, i32) {
    %c0_i32 = arith.constant 0 : i32
    %c0_i32_0 = arith.constant 0 : i32
    %c0_i32_1 = arith.constant 0 : i32
    return %c0_i32, %c0_i32_0 : i32, i32
  }
  func.func @transform_5(%arg0: i32) -> (i32, i32) {
    %c0_i32 = arith.constant 0 : i32
    %c0_i32_0 = arith.constant 0 : i32
    %c0_i32_1 = arith.constant 0 : i32
    return %c0_i32, %c0_i32_0 : i32, i32
  }
  func.func @transform_6(%arg0: i32) -> (i32, i32) {
    %c0_i32 = arith.constant 0 : i32
    %c0_i32_0 = arith.constant 0 : i32
    %c0_i32_1 = arith.constant 0 : i32
    return %c0_i32, %c0_i32_0 : i32, i32
  }
  func.func @transform_7(%arg0: i32) -> (i32, i32) {
    %c0_i32 = arith.constant 0 : i32
    %c0_i32_0 = arith.constant 0 : i32
    return %arg0, %c0_i32 : i32, i32
  }
}

</mosaic_0001>

<llo_original>
// kernel: tpu_custom_call.1
$region0: #{tpu_custom_call.1}
  #allocation0 [shape = 'u32[]', space=smem, size = 0x4, offset = 0x4, fixed_abs, tag = 'smem constant byte address 0x4 - core index']
  #allocation1 [shape = 'u32[144,128]{1,0:T(1,128)}', space=vmem, size = 0x12000, scoped, tag = 'internal scratch']
  #allocation2 [shape = 'f32[1,1]{1,0:T(1,128)S(1)}', space=vmem, size = 0x200, scoped, tag = 'scoped memory for tpu_custom_call.1']
  %s0 = inlined_call_operand.hbm [shape: f32[8,256], index: 0, kind: input, shape index: {}]
  %s1 = inlined_call_operand.vmem [shape: bf16[256,128], index: 1, kind: input, shape index: {}]
  %s2 = inlined_call_operand.vmem [shape: f32[1,128], index: 2, kind: input, shape index: {}]
  %s3 = inlined_call_operand.vmem [shape: bf16[128,64], index: 3, kind: input, shape index: {}]
  %s4 = inlined_call_operand.vmem [shape: f32[1,64], index: 4, kind: input, shape index: {}]
  %s5 = inlined_call_operand.vmem [shape: bf16[64,1], index: 5, kind: input, shape index: {}]
  %s6 = inlined_call_operand.<no memory space> [shape: f32[1,1], index: 6, kind: input, shape index: {}]
  %s7 = inlined_call_operand.vmem [shape: f32[8,2], index: 7, kind: output, shape index: {}]
  %s8 = sld [smem:[#allocation0]]
  $region42: #{tpu_custom_call.1} parent=0
    _
  %s10 = ssub.s32 1, %s8
  %s11 = scalar_select 0, %s10, %s8
  %v12 = vstv %s6
  %13 = vst [vmem:[#allocation2] sm:$0x1] %v12
  $region1: #{tpu_custom_call.1} parent=0
    #allocation3 [shape = 'u8[8192]{0}', space=vmem, size = 0x2000, scoped, tag = 'input window, operand 0, single buffered']
    #allocation4 [shape = 's32[1]{0}', space=sflag, size = 0x4, scoped, tag = 'scoped memory for tpu_custom_call.1']
    %14 = vsyncpa [#allocation4], 0
    // Predicated region
    $region2: #{tpu_custom_call.1} parent=1 // pred_check
      _
    $region3: #{tpu_custom_call.1} parent=1 // pred_check_branch
      %16 = sbr.rel (0) target = $region5
    $region4: #{tpu_custom_call.1} parent=1 // pred_region
      %s18 = ssub.s32 256, 256
      %19 = vsyncadd [#allocation4], %s18
      %s21 = sshll.u32 [#allocation3], 4
      %s22 = int_to_ptr.vmem [resolvable:$true] %s21
      %24 = dma.hbm_to_vmem [thread:$0]  %s0, 256, %s22, [#allocation4]
    $region5: #{tpu_custom_call.1} parent=1 // pred_fallthru
      _
    // Predicated region
    $region6: #{tpu_custom_call.1} parent=1 // pred_check
      _
    $region7: #{tpu_custom_call.1} parent=1 // pred_check_branch
      %26 = sbr.rel (0) target = $region9
    $region8: #{tpu_custom_call.1} parent=1 // pred_region
      _
    $region9: #{tpu_custom_call.1} parent=1 // pred_fallthru
      _
    // Predicated region
    $region10: #{tpu_custom_call.1} parent=1 // pred_check
      _
    $region11: #{tpu_custom_call.1} parent=1 // pred_check_branch
      %28 = sbr.rel (0) target = $region13
    $region12: #{tpu_custom_call.1} parent=1 // pred_region
      _
    $region13: #{tpu_custom_call.1} parent=1 // pred_fallthru
      _
    // Predicated region
    $region14: #{tpu_custom_call.1} parent=1 // pred_check
      _
    $region15: #{tpu_custom_call.1} parent=1 // pred_check_branch
      %30 = sbr.rel (0) target = $region17
    $region16: #{tpu_custom_call.1} parent=1 // pred_region
      _
    $region17: #{tpu_custom_call.1} parent=1 // pred_fallthru
      _
    // Predicated region
    $region18: #{tpu_custom_call.1} parent=1 // pred_check
      _
    $region19: #{tpu_custom_call.1} parent=1 // pred_check_branch
      %32 = sbr.rel (0) target = $region21
    $region20: #{tpu_custom_call.1} parent=1 // pred_region
      _
    $region21: #{tpu_custom_call.1} parent=1 // pred_fallthru
      _
    // Predicated region
    $region22: #{tpu_custom_call.1} parent=1 // pred_check
      _
    $region23: #{tpu_custom_call.1} parent=1 // pred_check_branch
      %34 = sbr.rel (0) target = $region25
    $region24: #{tpu_custom_call.1} parent=1 // pred_region
      _
    $region25: #{tpu_custom_call.1} parent=1 // pred_fallthru
      _
    // Predicated region
    $region26: #{tpu_custom_call.1} parent=1 // pred_check
      _
    $region27: #{tpu_custom_call.1} parent=1 // pred_check_branch
      %36 = sbr.rel (0) target = $region29
    $region28: #{tpu_custom_call.1} parent=1 // pred_region
      _
    $region29: #{tpu_custom_call.1} parent=1 // pred_fallthru
      _
    // Predicated region
    $region30: #{tpu_custom_call.1} parent=1 // pred_check
      _
    $region31: #{tpu_custom_call.1} parent=1 // pred_check_branch
      %38 = sbr.rel (0) target = $region33
    $region32: #{tpu_custom_call.1} parent=1 // pred_region
      %39 = dma.done [#allocation4], 256
    $region33: #{tpu_custom_call.1} parent=1 // pred_fallthru
      _
    %v41 = vld [vmem:[#allocation3] sm:$0xff]
    %v42 = vld [vmem:[#allocation3 + $0x8] sm:$0xff]
    %v43 = vpack.c.bf16 %v41, %v41
    %v44 = vpack.c.bf16 %v42, %v42
    %v45 = vld [vmem:[%s1] sm:$0xf]
    %v46 = vld [vmem:[%s1 + $0x4] sm:$0xf]
    %v47 = vld [vmem:[%s1 + $0x8] sm:$0xf]
    %v48 = vld [vmem:[%s1 + $0xc] sm:$0xf]
    %v49 = vld [vmem:[%s1 + $0x10] sm:$0xf]
    %v50 = vld [vmem:[%s1 + $0x14] sm:$0xf]
    %v51 = vld [vmem:[%s1 + $0x18] sm:$0xf]
    %v52 = vld [vmem:[%s1 + $0x1c] sm:$0xf]
    %v53 = vld [vmem:[%s1 + $0x20] sm:$0xf]
    %v54 = vld [vmem:[%s1 + $0x24] sm:$0xf]
    %v55 = vld [vmem:[%s1 + $0x28] sm:$0xf]
    %v56 = vld [vmem:[%s1 + $0x2c] sm:$0xf]
    %v57 = vld [vmem:[%s1 + $0x30] sm:$0xf]
    %v58 = vld [vmem:[%s1 + $0x34] sm:$0xf]
    %v59 = vld [vmem:[%s1 + $0x38] sm:$0xf]
    %v60 = vld [vmem:[%s1 + $0x3c] sm:$0xf]
    %v61 = vld [vmem:[%s1 + $0x40] sm:$0xf]
    %v62 = vld [vmem:[%s1 + $0x44] sm:$0xf]
    %v63 = vld [vmem:[%s1 + $0x48] sm:$0xf]
    %v64 = vld [vmem:[%s1 + $0x4c] sm:$0xf]
    %v65 = vld [vmem:[%s1 + $0x50] sm:$0xf]
    %v66 = vld [vmem:[%s1 + $0x54] sm:$0xf]
    %v67 = vld [vmem:[%s1 + $0x58] sm:$0xf]
    %v68 = vld [vmem:[%s1 + $0x5c] sm:$0xf]
    %v69 = vld [vmem:[%s1 + $0x60] sm:$0xf]
    %v70 = vld [vmem:[%s1 + $0x64] sm:$0xf]
    %v71 = vld [vmem:[%s1 + $0x68] sm:$0xf]
    %v72 = vld [vmem:[%s1 + $0x6c] sm:$0xf]
    %v73 = vld [vmem:[%s1 + $0x70] sm:$0xf]
    %v74 = vld [vmem:[%s1 + $0x74] sm:$0xf]
    %v75 = vld [vmem:[%s1 + $0x78] sm:$0xf]
    %v76 = vld [vmem:[%s1 + $0x7c] sm:$0xf]
    %v77 = vld [vmem:[%s2] sm:$0x1]
    %v79 = vlaneseq
    %v80 = vshrl.u32 %v79, 7
    %v81 = vsub.s32 0, %v80
    %v82 = vrot.slane %v77, %v81
    %v116 = vunpack.c.l.b16 %v45
    %v117 = vunpack.c.l.b16 %v46
    %v118 = vunpack.c.l.b16 %v47
    %v119 = vunpack.c.l.b16 %v48
    %v120 = vunpack.c.l.b16 %v49
    %v121 = vunpack.c.l.b16 %v50
    %v122 = vunpack.c.l.b16 %v51
    %v123 = vunpack.c.l.b16 %v52
    %v124 = vunpack.c.l.b16 %v53
    %v125 = vunpack.c.l.b16 %v54
    %v126 = vunpack.c.l.b16 %v55
    %v127 = vunpack.c.l.b16 %v56
    %v128 = vunpack.c.l.b16 %v57
    %v129 = vunpack.c.l.b16 %v58
    %v130 = vunpack.c.l.b16 %v59
    %v131 = vunpack.c.l.b16 %v60
    %v132 = vunpack.c.l.b16 %v61
    %v133 = vunpack.c.l.b16 %v62
    %v134 = vunpack.c.l.b16 %v63
    %v135 = vunpack.c.l.b16 %v64
    %v136 = vunpack.c.l.b16 %v65
    %v137 = vunpack.c.l.b16 %v66
    %v138 = vunpack.c.l.b16 %v67
    %v139 = vunpack.c.l.b16 %v68
    %v140 = vunpack.c.l.b16 %v69
    %v141 = vunpack.c.l.b16 %v70
    %v142 = vunpack.c.l.b16 %v71
    %v143 = vunpack.c.l.b16 %v72
    %v144 = vunpack.c.l.b16 %v73
    %v145 = vunpack.c.l.b16 %v74
    %v146 = vunpack.c.l.b16 %v75
    %v147 = vunpack.c.l.b16 %v76
    %v148 = vpack.c.b16 %v117, %v116
    %v149 = vpack.c.b16 %v119, %v118
    %v150 = vpack.c.b16 %v121, %v120
    %v151 = vpack.c.b16 %v123, %v122
    %v152 = vpack.c.b16 %v125, %v124
    %v153 = vpack.c.b16 %v127, %v126
    %v154 = vpack.c.b16 %v129, %v128
    %v155 = vpack.c.b16 %v131, %v130
    %v156 = vpack.c.b16 %v133, %v132
    %v157 = vpack.c.b16 %v135, %v134
    %v158 = vpack.c.b16 %v137, %v136
    %v159 = vpack.c.b16 %v139, %v138
    %v160 = vpack.c.b16 %v141, %v140
    %v161 = vpack.c.b16 %v143, %v142
    %v162 = vpack.c.b16 %v145, %v144
    %v163 = vpack.c.b16 %v147, %v146
    %180 = vmatprep.subr.bf16.mxu0 0
    %181 = vmatpush1.bf16.msra.mxu0 %v148
    %182 = vmatprep.subr.bf16.mxu0 0
    %183 = vmatpush1.bf16.msra.mxu0 %v149
    %184 = vmatprep.subr.bf16.mxu0 0
    %185 = vmatpush1.bf16.msra.mxu0 %v150
    %186 = vmatprep.subr.bf16.mxu0 0
    %187 = vmatpush1.bf16.msra.mxu0 %v151
    %188 = vmatprep.subr.bf16.mxu0 0
    %189 = vmatpush1.bf16.msra.mxu0 %v152
    %190 = vmatprep.subr.bf16.mxu0 0
    %191 = vmatpush1.bf16.msra.mxu0 %v153
    %192 = vmatprep.subr.bf16.mxu0 0
    %193 = vmatpush1.bf16.msra.mxu0 %v154
    %194 = vmatprep.subr.bf16.mxu0 0
    %195 = vmatpush1.bf16.msra.mxu0 %v155
    %196 = vmatprep.subr.bf16.mxu0 0
    %197 = vmatpush1.bf16.msra.mxu0 %v156
    %198 = vmatprep.subr.bf16.mxu0 0
    %199 = vmatpush1.bf16.msra.mxu0 %v157
    %200 = vmatprep.subr.bf16.mxu0 0
    %201 = vmatpush1.bf16.msra.mxu0 %v158
    %202 = vmatprep.subr.bf16.mxu0 0
    %203 = vmatpush1.bf16.msra.mxu0 %v159
    %204 = vmatprep.subr.bf16.mxu0 0
    %205 = vmatpush1.bf16.msra.mxu0 %v160
    %206 = vmatprep.subr.bf16.mxu0 0
    %207 = vmatpush1.bf16.msra.mxu0 %v161
    %208 = vmatprep.subr.bf16.mxu0 0
    %209 = vmatpush1.bf16.msra.mxu0 %v162
    %210 = vmatprep.subr.bf16.mxu0 0
    %211 = vmatpush1.bf16.msra.mxu0 %v163
    %212 = vmatprep.mubr.bf16.mxu0 %v44
    %213 = vmatmul.mubr.bf16.gmra.mrb[0].mxu0 %v43
    %v214 = vpop.f32.mrb[0].mxu0
    %v215 = vadd.f32 %v82, %v214
    %v216 = vpop.f32.mrb[0].mxu0
    %v217 = vpop.f32.mrb[0].mxu0
    %v218 = vpop.f32.mrb[0].mxu0
    %219 = vdwg.mxu0
    %v220 = vmax.f32 %v215, 0.0
    %v221 = vpack.c.bf16 %v220, %v220
    %v222 = vld [vmem:[%s3] sm:$0xf]
    %v223 = vld [vmem:[%s3 + $0x4] sm:$0xf]
    %v224 = vld [vmem:[%s3 + $0x8] sm:$0xf]
    %v225 = vld [vmem:[%s3 + $0xc] sm:$0xf]
    %v226 = vld [vmem:[%s3 + $0x10] sm:$0xf]
    %v227 = vld [vmem:[%s3 + $0x14] sm:$0xf]
    %v228 = vld [vmem:[%s3 + $0x18] sm:$0xf]
    %v229 = vld [vmem:[%s3 + $0x1c] sm:$0xf]
    %v230 = vld [vmem:[%s3 + $0x20] sm:$0xf]
    %v231 = vld [vmem:[%s3 + $0x24] sm:$0xf]
    %v232 = vld [vmem:[%s3 + $0x28] sm:$0xf]
    %v233 = vld [vmem:[%s3 + $0x2c] sm:$0xf]
    %v234 = vld [vmem:[%s3 + $0x30] sm:$0xf]
    %v235 = vld [vmem:[%s3 + $0x34] sm:$0xf]
    %v236 = vld [vmem:[%s3 + $0x38] sm:$0xf]
    %v237 = vld [vmem:[%s3 + $0x3c] sm:$0xf]
    %v238 = vld [vmem:[%s4] sm:$0x1]
    %v240 = vlaneseq
    %v241 = vshrl.u32 %v240, 7
    %v242 = vsub.s32 0, %v241
    %v243 = vrot.slane %v238, %v242
    %v261 = vunpack.c.l.b16 %v222
    %v262 = vunpack.c.l.b16 %v223
    %v263 = vunpack.c.l.b16 %v224
    %v264 = vunpack.c.l.b16 %v225
    %v265 = vunpack.c.l.b16 %v226
    %v266 = vunpack.c.l.b16 %v227
    %v267 = vunpack.c.l.b16 %v228
    %v268 = vunpack.c.l.b16 %v229
    %v269 = vunpack.c.l.b16 %v230
    %v270 = vunpack.c.l.b16 %v231
    %v271 = vunpack.c.l.b16 %v232
    %v272 = vunpack.c.l.b16 %v233
    %v273 = vunpack.c.l.b16 %v234
    %v274 = vunpack.c.l.b16 %v235
    %v275 = vunpack.c.l.b16 %v236
    %v276 = vunpack.c.l.b16 %v237
    %v277 = vpack.c.b16 %v262, %v261
    %v278 = vpack.c.b16 %v264, %v263
    %v279 = vpack.c.b16 %v266, %v265
    %v280 = vpack.c.b16 %v268, %v267
    %v281 = vpack.c.b16 %v270, %v269
    %v282 = vpack.c.b16 %v272, %v271
    %v283 = vpack.c.b16 %v274, %v273
    %v284 = vpack.c.b16 %v276, %v275
    %293 = vmatprep.subr.bf16.mxu0 0
    %294 = vmatpush1.bf16.msra.mxu0 %v277
    %295 = vmatprep.subr.bf16.mxu0 0
    %296 = vmatpush1.bf16.msra.mxu0 %v278
    %297 = vmatprep.subr.bf16.mxu0 0
    %298 = vmatpush1.bf16.msra.mxu0 %v279
    %299 = vmatprep.subr.bf16.mxu0 0
    %300 = vmatpush1.bf16.msra.mxu0 %v280
    %301 = vmatprep.subr.bf16.mxu0 0
    %302 = vmatpush1.bf16.msra.mxu0 %v281
    %303 = vmatprep.subr.bf16.mxu0 0
    %304 = vmatpush1.bf16.msra.mxu0 %v282
    %305 = vmatprep.subr.bf16.mxu0 0
    %306 = vmatpush1.bf16.msra.mxu0 %v283
    %307 = vmatprep.subr.bf16.mxu0 0
    %308 = vmatpush1.bf16.msra.mxu0 %v284
    %309 = vmatprep.subr.bf16.mxu0 0
    %310 = vmatpush1.bf16.msra.mxu0 0
    %311 = vmatprep.subr.bf16.mxu0 0
    %312 = vmatpush1.bf16.msra.mxu0 0
    %313 = vmatprep.subr.bf16.mxu0 0
    %314 = vmatpush1.bf16.msra.mxu0 0
    %315 = vmatprep.subr.bf16.mxu0 0
    %316 = vmatpush1.bf16.msra.mxu0 0
    %317 = vmatprep.subr.bf16.mxu0 0
    %318 = vmatpush1.bf16.msra.mxu0 0
    %319 = vmatprep.subr.bf16.mxu0 0
    %320 = vmatpush1.bf16.msra.mxu0 0
    %321 = vmatprep.subr.bf16.mxu0 0
    %322 = vmatpush1.bf16.msra.mxu0 0
    %323 = vmatprep.subr.bf16.mxu0 0
    %324 = vmatpush1.bf16.msra.mxu0 0
    %325 = vmatprep.mubr.bf16.mxu0 0
    %326 = vmatmul.mubr.bf16.gmra.mrb[0].mxu0 %v221
    %v327 = vpop.f32.mrb[0].mxu0
    %v328 = vadd.f32 %v243, %v327
    %v329 = vpop.f32.mrb[0].mxu0
    %v330 = vpop.f32.mrb[0].mxu0
    %v331 = vpop.f32.mrb[0].mxu0
    %332 = vdwg.mxu0
    %v333 = vmax.f32 %v328, 0.0
    %v334 = vpack.c.bf16 %v333, %v333
    %v335 = vld [vmem:[%s5] sm:$0xf]
    %v336 = vld [vmem:[%s5 + $0x4] sm:$0xf]
    %v337 = vld [vmem:[%s5 + $0x8] sm:$0xf]
    %v338 = vld [vmem:[%s5 + $0xc] sm:$0xf]
    %v339 = vld [vmem:[%s5 + $0x10] sm:$0xf]
    %v340 = vld [vmem:[%s5 + $0x14] sm:$0xf]
    %v341 = vld [vmem:[%s5 + $0x18] sm:$0xf]
    %v342 = vld [vmem:[%s5 + $0x1c] sm:$0xf]
    %v343 = vld [vmem:[#allocation2] sm:$0x1]
    %v345 = vlaneseq
    %v346 = vshrl.u32 %v345, 7
    %v347 = vsub.s32 0, %v346
    %v348 = vrot.slane %v343, %v347
    %v358 = vunpack.c.l.b16 %v335
    %v359 = vunpack.c.l.b16 %v336
    %v360 = vunpack.c.l.b16 %v337
    %v361 = vunpack.c.l.b16 %v338
    %v362 = vunpack.c.l.b16 %v339
    %v363 = vunpack.c.l.b16 %v340
    %v364 = vunpack.c.l.b16 %v341
    %v365 = vunpack.c.l.b16 %v342
    %v366 = vpack.c.b16 %v359, %v358
    %v367 = vpack.c.b16 %v361, %v360
    %v368 = vpack.c.b16 %v363, %v362
    %v369 = vpack.c.b16 %v365, %v364
    %vm374 = vcmask 523264
    %v376 = vsel %vm374, %v334, 0
    %378 = vmatprep.subr.bf16.mxu0 0
    %379 = vmatpush1.bf16.msra.mxu0 %v366
    %380 = vmatprep.subr.bf16.mxu0 0
    %381 = vmatpush1.bf16.msra.mxu0 %v367
    %382 = vmatprep.subr.bf16.mxu0 0
    %383 = vmatpush1.bf16.msra.mxu0 %v368
    %384 = vmatprep.subr.bf16.mxu0 0
    %385 = vmatpush1.bf16.msra.mxu0 %v369
    %386 = vmatprep.subr.bf16.mxu0 0
    %387 = vmatpush1.bf16.msra.mxu0 0
    %388 = vmatprep.subr.bf16.mxu0 0
    %389 = vmatpush1.bf16.msra.mxu0 0
    %390 = vmatprep.subr.bf16.mxu0 0
    %391 = vmatpush1.bf16.msra.mxu0 0
    %392 = vmatprep.subr.bf16.mxu0 0
    %393 = vmatpush1.bf16.msra.mxu0 0
    %394 = vmatprep.subr.bf16.mxu0 0
    %395 = vmatpush1.bf16.msra.mxu0 0
    %396 = vmatprep.subr.bf16.mxu0 0
    %397 = vmatpush1.bf16.msra.mxu0 0
    %398 = vmatprep.subr.bf16.mxu0 0
    %399 = vmatpush1.bf16.msra.mxu0 0
    %400 = vmatprep.subr.bf16.mxu0 0
    %401 = vmatpush1.bf16.msra.mxu0 0
    %402 = vmatprep.subr.bf16.mxu0 0
    %403 = vmatpush1.bf16.msra.mxu0 0
    %404 = vmatprep.subr.bf16.mxu0 0
    %405 = vmatpush1.bf16.msra.mxu0 0
    %406 = vmatprep.subr.bf16.mxu0 0
    %407 = vmatpush1.bf16.msra.mxu0 0
    %408 = vmatprep.subr.bf16.mxu0 0
    %409 = vmatpush1.bf16.msra.mxu0 0
    %410 = vmatprep.mubr.bf16.mxu0 0
    %411 = vmatmul.mubr.bf16.gmra.mrb[0].mxu0 %v376
    %v412 = vpop.f32.mrb[0].mxu0
    %v413 = vadd.f32 %v348, %v412
    %v414 = vpop.f32.mrb[0].mxu0
    %v415 = vpop.f32.mrb[0].mxu0
    %v416 = vpop.f32.mrb[0].mxu0
    %417 = vdwg.mxu0
    %v418 = vsub.f32 0.0, %v413
    %v419 = vmul.f32 %v418, 1.442695
    %v420 = vpow.pop %v419
    %v421 = vadd.f32 %v420, 1.0
    %v422 = vrcp.pop %v421
    %v423 = vmul.f32 1.0, %v422
    %vm424 = vcmask 7168
    %425 = vst.msk [vmem:[%s7] sm:$0xff] %vm424, %v423
    %v426 = vsub.f32 1.0, %v423
    %428 = vrot.lane.b32.xlu0 %v426, 1
    %v429 = vpop.permute.xlu0 %428
    %vm431 = vcmask 15368
    %432 = vst.msk [vmem:[%s7] sm:$0xff] %vm431, %v429
    // Predicated region
    $region34: #{tpu_custom_call.1} parent=1 // pred_check
      _
    $region35: #{tpu_custom_call.1} parent=1 // pred_check_branch
      %434 = sbr.rel (0) target = $region37
    $region36: #{tpu_custom_call.1} parent=1 // pred_region
      _
    $region37: #{tpu_custom_call.1} parent=1 // pred_fallthru
      _
    // Predicated region
    $region38: #{tpu_custom_call.1} parent=1 // pred_check
      _
    $region39: #{tpu_custom_call.1} parent=1 // pred_check_branch
      %436 = sbr.rel (0) target = $region41
    $region40: #{tpu_custom_call.1} parent=1 // pred_region
      _
    $region41: #{tpu_custom_call.1} parent=1 // pred_fallthru
      _
    %437 = vsyncpa [#allocation4], 1

</llo_original>
